<compile_context>
chip_gen: v6e
topology: v6e:2x2x1
jax: 0.10.0
libtpu: 0.0.40
codegen_flags: <defaults>
</compile_context>

<pallas_src>
import numpy as np
import jax
import jax.numpy as jnp
from jax import lax
from jax.experimental import pallas as pl
from jax.experimental.pallas import tpu as pltpu

MAX_TILE_ROWS = 8192          # upper bound on rows per mel tile
TARGET_TILE_BYTES = 2 << 20   # ~2 MiB per mel tensor per grid step


def _cdiv(a, b):
    return -(-a // b)


def _round_down(x, m):
    return (x // m) * m


def _sublane_multiple(dtype):
    # f32 -> 8, bf16 -> 16, int8/fp8 -> 32 (keeps tiles vreg-aligned).
    return max(8, 32 // jnp.dtype(dtype).itemsize)


def _num_row_shards():
    """2 TensorCores per chip on v4 / v5p / v7x; 1 on v2/v3/v5e/v6e."""
    try:
        kind = jax.devices()[0].device_kind.lower()
    except Exception:
        return 1
    if ("lite" in kind) or ("v5e" in kind) or ("v6e" in kind) or ("v2" in kind) or ("v3" in kind):
        return 1
    if ("v7" in kind) or ("v4" in kind) or ("v5p" in kind) or ("v5" in kind):
        return 2
    return 1


# ----------------------------- mel MSE kernel ------------------------------

def _make_mel_kernel(tile_rows, tiles_per_shard, total_rows, n_mels, needs_mask):
    fold = (tile_rows % 8 == 0)

    def kernel(p_ref, t_ref, out_ref):
        c = pl.program_id(0)   # row-shard ("parallel")
        i = pl.program_id(1)   # tile within shard ("arbitrary", reduction)

        @pl.when(i == 0)
        def _init():
            out_ref[...] = jnp.zeros_like(out_ref)

        d = p_ref[...].astype(jnp.float32) - t_ref[...].astype(jnp.float32)

        if needs_mask:
            # Mask rows beyond the true end of the flattened mel tensor
            # (ragged last tile and/or duplicated overhang tile of a shard).
            row_start = (c * tiles_per_shard + i) * tile_rows
            rows = lax.broadcasted_iota(jnp.int32, d.shape, 0) + row_start
            d = jnp.where(rows < total_rows, d, 0.0)

        dd = d * d
        if fold:
            # Pure VPU vreg-wise adds: (tile_rows, n_mels) -> (8, n_mels).
            part = jnp.sum(dd.reshape(tile_rows // 8, 8, n_mels), axis=0)
        else:
            # Tiny-input path (tile_rows < 8 or unaligned full-extent block).
            part = jnp.concatenate(
                [jnp.sum(dd, axis=0, keepdims=True),
                 jnp.zeros((7, n_mels), jnp.float32)], axis=0)
        out_ref[...] += part

    return kernel


# ------------------- duration / energy / pitch losses ----------------------

def _small_losses_kernel(dur_p_ref, dur_t_ref, en_p_ref, en_t_ref,
                         pit_p_ref, pit_t_ref, out_ref):
    def mse_vs_log1p(p_ref, t_ref):
        t = jnp.log(t_ref[...].astype(jnp.float32) + 1.0)
        d = p_ref[...].astype(jnp.float32) - t
        return jnp.mean(d * d)

    dur = mse_vs_log1p(dur_p_ref, dur_t_ref)
    en = mse_vs_log1p(en_p_ref, en_t_ref)
    pit = mse_vs_log1p(pit_p_ref, pit_t_ref)

    rows = lax.broadcasted_iota(jnp.int32, out_ref.shape, 0)
    out_ref[...] = jnp.where(rows == 0, dur,
                   jnp.where(rows == 1, en,
                   jnp.where(rows == 2, pit, 0.0)))


# --------------------------------- wrapper ---------------------------------

def fastspeech2_loss(mel_pred, duration_pred, pitch_pred, energy_pred,
                     mel_target, duration_target, energy_target, pitch_target):
    """Returns a dict matching the PyTorch module's output (scalar losses)."""
    assert mel_pred.shape == mel_target.shape
    n_mels = int(mel_pred.shape[-1])
    n_mel_elems = int(np.prod(mel_pred.shape))
    total_rows = n_mel_elems // n_mels

    # Metadata-only collapse of the leading axes: NO pad, NO extra HBM copy.
    mel_p2 = mel_pred.reshape(total_rows, n_mels)
    mel_t2 = mel_target.reshape(total_rows, n_mels)

    mel_item = jnp.dtype(mel_pred.dtype).itemsize
    sub = _sublane_multiple(mel_pred.dtype)

    # --- tile plan: ~2 MiB per tensor per step, sublane-aligned rows ---
    if total_rows >= sub:
        rows_for_target = max(sub, _round_down(TARGET_TILE_BYTES // (n_mels * mel_item), sub))
        tile_rows = min(MAX_TILE_ROWS, rows_for_target, _round_down(total_rows, sub))
    else:
        tile_rows = total_rows            # full-extent block (tiny input)
    total_tiles = _cdiv(total_rows, tile_rows)
    num_shards = max(1, min(_num_row_shards(), total_tiles))
    tiles_per_shard = _cdiv(total_tiles, num_shards)
    needs_mask = (num_shards * tiles_per_shard * tile_rows != total_rows)

    kernel = _make_mel_kernel(tile_rows, tiles_per_shard, total_rows, n_mels, needs_mask)

    def mel_index_map(c, i):
        blk = c * tiles_per_shard + i
        return (jnp.minimum(blk, total_tiles - 1), 0)   # clamp shard overhang (masked anyway)

    mel_spec = pl.BlockSpec((tile_rows, n_mels), mel_index_map)
    out_spec = pl.BlockSpec((8, n_mels), lambda c, i: (c, 0))
    out_shape = jax.ShapeDtypeStruct((num_shards * 8, n_mels), jnp.float32)

    tile_bytes = tile_rows * n_mels * mel_item
    out_bytes = num_shards * 8 * n_mels * 4
    vmem_limit = int(2 * 2 * tile_bytes      # 2 mel inputs, double-buffered
                     + 2 * out_bytes         # resident output accumulator block
                     + (8 << 20))            # compiler scratch headroom
    cost = pl.CostEstimate(
        flops=3 * n_mel_elems,
        transcendentals=0,
        bytes_accessed=int(2 * n_mel_elems * mel_item + out_bytes),
    )

    mel_partials = pl.pallas_call(
        kernel,
        grid=(num_shards, tiles_per_shard),
        in_specs=[mel_spec, mel_spec],
        out_specs=out_spec,
        out_shape=out_shape,
        compiler_params=pltpu.CompilerParams(
            dimension_semantics=("parallel", "arbitrary"),
            vmem_limit_bytes=vmem_limit),
        cost_estimate=cost,
    )(mel_p2, mel_t2)

    # Tiny duration / energy / pitch MSEs: single-step kernel, whole-array VMEM blocks.
    small = pl.pallas_call(
        _small_losses_kernel,
        out_shape=jax.ShapeDtypeStruct((8, 128), jnp.float32),
    )(duration_pred, duration_target,
      energy_pred, energy_target,
      pitch_pred, pitch_target)

    # Tiny final combine in the wrapper.
    mel_loss = jnp.sum(mel_partials) / jnp.float32(n_mel_elems)
    duration_loss = small[0, 0]
    energy_loss = small[1, 0]
    pitch_loss = small[2, 0]
    loss = mel_loss + duration_loss + energy_loss + pitch_loss
    return {
        'loss': loss,
        'mel_loss': mel_loss,
        'duration_loss': duration_loss,
        'energy_loss': energy_loss,
        'pitch_loss': pitch_loss,
    }


# -------------------------------- reference ---------------------------------

def _reference(mel_pred, duration_pred, pitch_pred, energy_pred,
               mel_target, duration_target, energy_target, pitch_target):
    mel_loss = jnp.mean((mel_pred - mel_target) ** 2)
    dur_loss = jnp.mean((duration_pred -
                         jnp.log(duration_target.astype(jnp.float32) + 1.0)) ** 2)
    en_loss = jnp.mean((energy_pred - jnp.log(energy_target + 1.0)) ** 2)
    pit_loss = jnp.mean((pitch_pred - jnp.log(pitch_target + 1.0)) ** 2)
    return {
        'loss': mel_loss + dur_loss + en_loss + pit_loss,
        'mel_loss': mel_loss,
        'duration_loss': dur_loss,
        'energy_loss': en_loss,
        'pitch_loss': pit_loss,
    }


if __name__ == "__main__":
    key = jax.random.PRNGKey(0)
    k = jax.random.split(key, 8)

    B, T_mel, N_MELS, T_SEQ = 2, 16, 32, 8

    mel_pred = jax.random.normal(k[0], (B, T_mel, N_MELS), dtype=jnp.float32)
    mel_target = jax.random.normal(k[1], (B, T_mel, N_MELS), dtype=jnp.float32)

    duration_pred = jax.random.normal(k[2], (B, T_SEQ), dtype=jnp.float32)
    duration_target = jax.random.randint(k[3], (B, T_SEQ), 0, 10, dtype=jnp.int32)

    energy_pred = jax.random.normal(k[4], (B, T_SEQ), dtype=jnp.float32)
    energy_target = jax.random.uniform(k[5], (B, T_SEQ), dtype=jnp.float32,
                                       minval=0.0, maxval=5.0)

    pitch_pred = jax.random.normal(k[6], (B, T_SEQ), dtype=jnp.float32)
    pitch_target = jax.random.uniform(k[7], (B, T_SEQ), dtype=jnp.float32,
                                      minval=0.0, maxval=5.0)

    fs2_loss = jax.jit(fastspeech2_loss)
    out = fs2_loss(mel_pred, duration_pred, pitch_pred, energy_pred,
                   mel_target, duration_target, energy_target, pitch_target)
    jax.block_until_ready(out['loss'])

    ref = _reference(mel_pred, duration_pred, pitch_pred, energy_pred,
                     mel_target, duration_target, energy_target, pitch_target)
    for name in ('loss', 'mel_loss', 'duration_loss', 'energy_loss', 'pitch_loss'):
        assert np.allclose(np.asarray(out[name]), np.asarray(ref[name]),
                           rtol=1e-5, atol=1e-5), (name, out[name], ref[name])

    print("KERNEL_OK")
</pallas_src>

<mosaic_0001>
module attributes {stable_mosaic.version = 11 : i64} {
  func.func @kernel(%arg0: i32, %arg1: i32, %arg2: memref<32x32xf32, #tpu.memory_space<vmem>>, %arg3: memref<32x32xf32, #tpu.memory_space<vmem>>, %arg4: memref<8x32xf32, #tpu.memory_space<vmem>>) attributes {dimension_semantics = [#tpu.dimension_semantics<parallel>, #tpu.dimension_semantics<arbitrary>], iteration_bounds = array<i64: 1, 1>, scalar_prefetch = 0 : i64, scratch_operands = 0 : i64, tpu.core_type = #tpu.core_type<tc>, window_params = [{transform_indices = @transform_0, window_bounds = array<i64: 32, 32>}, {transform_indices = @transform_1, window_bounds = array<i64: 32, 32>}, {transform_indices = @transform_2, window_bounds = array<i64: 8, 32>}]} {
    %c0_i32 = arith.constant 0 : i32
    %0 = arith.cmpi eq, %arg1, %c0_i32 : i32
    %1 = arith.extui %0 : i1 to i32
    %c0_i32_0 = arith.constant 0 : i32
    %2 = arith.cmpi ne, %1, %c0_i32_0 : i32
    scf.if %2 {
      %cst_8 = arith.constant 0.000000e+00 : f32
      %12 = vector.broadcast %cst_8 : f32 to vector<8x32xf32>
      %c0_9 = arith.constant 0 : index
      %c0_10 = arith.constant 0 : index
      %13 = vector.load %arg4[%c0_9, %c0_10] : memref<8x32xf32, #tpu.memory_space<vmem>>, vector<8x32xf32>
      tpu.vector_store %arg4[%c0_9, %c0_10], %12 {strides = array<i32>} : memref<8x32xf32, #tpu.memory_space<vmem>>, vector<8x32xf32>,
    } else {
    }
    %c0 = arith.constant 0 : index
    %c0_1 = arith.constant 0 : index
    %3 = vector.load %arg2[%c0, %c0_1] : memref<32x32xf32, #tpu.memory_space<vmem>>, vector<32x32xf32>
    %c0_2 = arith.constant 0 : index
    %c0_3 = arith.constant 0 : index
    %4 = vector.load %arg3[%c0_2, %c0_3] : memref<32x32xf32, #tpu.memory_space<vmem>>, vector<32x32xf32>
    %5 = arith.subf %3, %4 : vector<32x32xf32>
    %6 = arith.mulf %5, %5 : vector<32x32xf32>
    %7 = vector.shape_cast %6 : vector<32x32xf32> to vector<4x8x32xf32>
    %cst = arith.constant dense<0.000000e+00> : vector<8x32xf32>
    %8 = vector.multi_reduction <add>, %7, %cst [0] : vector<4x8x32xf32> to vector<8x32xf32>
    %c0_4 = arith.constant 0 : index
    %c0_5 = arith.constant 0 : index
    %9 = vector.load %arg4[%c0_4, %c0_5] : memref<8x32xf32, #tpu.memory_space<vmem>>, vector<8x32xf32>
    %10 = arith.addf %9, %8 : vector<8x32xf32>
    %c0_6 = arith.constant 0 : index
    %c0_7 = arith.constant 0 : index
    %11 = vector.load %arg4[%c0_6, %c0_7] : memref<8x32xf32, #tpu.memory_space<vmem>>, vector<8x32xf32>
    tpu.vector_store %arg4[%c0_6, %c0_7], %10 {strides = array<i32>} : memref<8x32xf32, #tpu.memory_space<vmem>>, vector<8x32xf32>,
    return
  }
  func.func @transform_0(%arg0: i32, %arg1: i32) -> (i32, i32) {
    %c1_i32 = arith.constant 1 : i32
    %0 = arith.muli %arg0, %c1_i32 : i32
    %1 = arith.addi %0, %arg1 : i32
    %c0_i32 = arith.constant 0 : i32
    %2 = arith.minsi %1, %c0_i32 : i32
    %c0_i32_0 = arith.constant 0 : i32
    %c0_i32_1 = arith.constant 0 : i32
    return %2, %c0_i32_0 : i32, i32
  }
  func.func @transform_1(%arg0: i32, %arg1: i32) -> (i32, i32) {
    %c1_i32 = arith.constant 1 : i32
    %0 = arith.muli %arg0, %c1_i32 : i32
    %1 = arith.addi %0, %arg1 : i32
    %c0_i32 = arith.constant 0 : i32
    %2 = arith.minsi %1, %c0_i32 : i32
    %c0_i32_0 = arith.constant 0 : i32
    %c0_i32_1 = arith.constant 0 : i32
    return %2, %c0_i32_0 : i32, i32
  }
  func.func @transform_2(%arg0: i32, %arg1: i32) -> (i32, i32) {
    %c0_i32 = arith.constant 0 : i32
    %c0_i32_0 = arith.constant 0 : i32
    return %arg0, %c0_i32 : i32, i32
  }
}

module attributes {stable_mosaic.version = 11 : i64} {
  func.func @_small_losses_kernel(%arg0: memref<2x8xf32, #tpu.memory_space<vmem>>, %arg1: memref<2x8xi32, #tpu.memory_space<vmem>>, %arg2: memref<2x8xf32, #tpu.memory_space<vmem>>, %arg3: memref<2x8xf32, #tpu.memory_space<vmem>>, %arg4: memref<2x8xf32, #tpu.memory_space<vmem>>, %arg5: memref<2x8xf32, #tpu.memory_space<vmem>>, %arg6: memref<8x128xf32, #tpu.memory_space<vmem>>) attributes {dimension_semantics = [], scalar_prefetch = 0 : i64, scratch_operands = 0 : i64, tpu.core_type = #tpu.core_type<tc>} {
    %c0 = arith.constant 0 : index
    %c0_0 = arith.constant 0 : index
    %0 = vector.load %arg1[%c0, %c0_0] : memref<2x8xi32, #tpu.memory_space<vmem>>, vector<2x8xi32>
    %1 = arith.sitofp %0 : vector<2x8xi32> to vector<2x8xf32>
    %cst = arith.constant 1.000000e+00 : f32
    %2 = vector.broadcast %cst : f32 to vector<2x8xf32>
    %3 = arith.addf %1, %2 : vector<2x8xf32>
    %4 = math.log %3 : vector<2x8xf32>
    %c0_1 = arith.constant 0 : index
    %c0_2 = arith.constant 0 : index
    %5 = vector.load %arg0[%c0_1, %c0_2] : memref<2x8xf32, #tpu.memory_space<vmem>>, vector<2x8xf32>
    %6 = arith.subf %5, %4 : vector<2x8xf32>
    %7 = arith.mulf %6, %6 : vector<2x8xf32>
    %8 = vector.shape_cast %7 : vector<2x8xf32> to vector<1x2x8xf32>
    %cst_3 = arith.constant dense<0.000000e+00> : vector<1xf32>
    %9 = vector.multi_reduction <add>, %8, %cst_3 [1, 2] : vector<1x2x8xf32> to vector<1xf32>
    %10 = vector.shape_cast %9 : vector<1xf32> to vector<1x1x1xf32>
    %11 = vector.extract %10[0, 0, 0] : f32 from vector<1x1x1xf32>
    %cst_4 = arith.constant 1.600000e+01 : f32
    %12 = arith.divf %11, %cst_4 : f32
    %c0_5 = arith.constant 0 : index
    %c0_6 = arith.constant 0 : index
    %13 = vector.load %arg3[%c0_5, %c0_6] : memref<2x8xf32, #tpu.memory_space<vmem>>, vector<2x8xf32>
    %cst_7 = arith.constant 1.000000e+00 : f32
    %14 = vector.broadcast %cst_7 : f32 to vector<2x8xf32>
    %15 = arith.addf %13, %14 : vector<2x8xf32>
    %16 = math.log %15 : vector<2x8xf32>
    %c0_8 = arith.constant 0 : index
    %c0_9 = arith.constant 0 : index
    %17 = vector.load %arg2[%c0_8, %c0_9] : memref<2x8xf32, #tpu.memory_space<vmem>>, vector<2x8xf32>
    %18 = arith.subf %17, %16 : vector<2x8xf32>
    %19 = arith.mulf %18, %18 : vector<2x8xf32>
    %20 = vector.shape_cast %19 : vector<2x8xf32> to vector<1x2x8xf32>
    %cst_10 = arith.constant dense<0.000000e+00> : vector<1xf32>
    %21 = vector.multi_reduction <add>, %20, %cst_10 [1, 2] : vector<1x2x8xf32> to vector<1xf32>
    %22 = vector.shape_cast %21 : vector<1xf32> to vector<1x1x1xf32>
    %23 = vector.extract %22[0, 0, 0] : f32 from vector<1x1x1xf32>
    %cst_11 = arith.constant 1.600000e+01 : f32
    %24 = arith.divf %23, %cst_11 : f32
    %c0_12 = arith.constant 0 : index
    %c0_13 = arith.constant 0 : index
    %25 = vector.load %arg5[%c0_12, %c0_13] : memref<2x8xf32, #tpu.memory_space<vmem>>, vector<2x8xf32>
    %cst_14 = arith.constant 1.000000e+00 : f32
    %26 = vector.broadcast %cst_14 : f32 to vector<2x8xf32>
    %27 = arith.addf %25, %26 : vector<2x8xf32>
    %28 = math.log %27 : vector<2x8xf32>
    %c0_15 = arith.constant 0 : index
    %c0_16 = arith.constant 0 : index
    %29 = vector.load %arg4[%c0_15, %c0_16] : memref<2x8xf32, #tpu.memory_space<vmem>>, vector<2x8xf32>
    %30 = arith.subf %29, %28 : vector<2x8xf32>
    %31 = arith.mulf %30, %30 : vector<2x8xf32>
    %32 = vector.shape_cast %31 : vector<2x8xf32> to vector<1x2x8xf32>
    %cst_17 = arith.constant dense<0.000000e+00> : vector<1xf32>
    %33 = vector.multi_reduction <add>, %32, %cst_17 [1, 2] : vector<1x2x8xf32> to vector<1xf32>
    %34 = vector.shape_cast %33 : vector<1xf32> to vector<1x1x1xf32>
    %35 = vector.extract %34[0, 0, 0] : f32 from vector<1x1x1xf32>
    %cst_18 = arith.constant 1.600000e+01 : f32
    %36 = arith.divf %35, %cst_18 : f32
    %37 = tpu.iota {dimensions = array<i32: 0>} : vector<8x128xi32>
    %c0_i32 = arith.constant 0 : i32
    %38 = vector.broadcast %c0_i32 : i32 to vector<8x128xi32>
    %39 = arith.cmpi eq, %37, %38 : vector<8x128xi32>
    %c1_i32 = arith.constant 1 : i32
    %40 = vector.broadcast %c1_i32 : i32 to vector<8x128xi32>
    %41 = arith.cmpi eq, %37, %40 : vector<8x128xi32>
    %c2_i32 = arith.constant 2 : i32
    %42 = vector.broadcast %c2_i32 : i32 to vector<8x128xi32>
    %43 = arith.cmpi eq, %37, %42 : vector<8x128xi32>
    %cst_19 = arith.constant 0.000000e+00 : f32
    %44 = vector.broadcast %36 : f32 to vector<8x128xf32>
    %45 = vector.broadcast %cst_19 : f32 to vector<8x128xf32>
    %46 = arith.select %43, %44, %45 : vector<8x128xi1>, vector<8x128xf32>
    %47 = vector.broadcast %24 : f32 to vector<8x128xf32>
    %48 = arith.select %41, %47, %46 : vector<8x128xi1>, vector<8x128xf32>
    %49 = vector.broadcast %12 : f32 to vector<8x128xf32>
    %50 = arith.select %39, %49, %48 : vector<8x128xi1>, vector<8x128xf32>
    %c0_20 = arith.constant 0 : index
    %c0_21 = arith.constant 0 : index
    %51 = vector.load %arg6[%c0_20, %c0_21] : memref<8x128xf32, #tpu.memory_space<vmem>>, vector<8x128xf32>
    tpu.vector_store %arg6[%c0_20, %c0_21], %50 {strides = array<i32>} : memref<8x128xf32, #tpu.memory_space<vmem>>, vector<8x128xf32>,
    return
  }
}

</mosaic_0001>

<llo_original>
// kernel: fastspeech2_loss.3
$region0: #{fastspeech2_loss.3}
  #allocation0 [shape = 'u32[]', space=smem, size = 0x4, offset = 0x4, fixed_abs, tag = 'smem constant byte address 0x4 - core index']
  #allocation1 [shape = 'u32[144,128]{1,0:T(1,128)}', space=vmem, size = 0x12000, scoped, tag = 'internal scratch']
  %s0 = inlined_call_operand.vmem [shape: f32[2,8], index: 0, kind: input, shape index: {}]
  %s1 = inlined_call_operand.vmem [shape: s32[2,8], index: 1, kind: input, shape index: {}]
  %s2 = inlined_call_operand.vmem [shape: f32[2,8], index: 2, kind: input, shape index: {}]
  %s3 = inlined_call_operand.vmem [shape: f32[2,8], index: 3, kind: input, shape index: {}]
  %s4 = inlined_call_operand.vmem [shape: f32[2,8], index: 4, kind: input, shape index: {}]
  %s5 = inlined_call_operand.vmem [shape: f32[2,8], index: 5, kind: input, shape index: {}]
  %s6 = inlined_call_operand.vmem [shape: f32[8,128], index: 6, kind: output, shape index: {}]
  %s7 = sld [smem:[#allocation0]]
  $region34: #{fastspeech2_loss.3} parent=0
    _
  %s9 = ssub.s32 1, %s7
  %s10 = scalar_select 0, %s9, %s7
  // Predicated region
  $region2: #{fastspeech2_loss.3} parent=0 // pred_check
    _
  $region3: #{fastspeech2_loss.3} parent=0 // pred_check_branch
    %12 = sbr.rel (0) target = $region5
  $region4: #{fastspeech2_loss.3} parent=0 // pred_region
    _
  $region5: #{fastspeech2_loss.3} parent=0 // pred_fallthru
    _
  // Predicated region
  $region6: #{fastspeech2_loss.3} parent=0 // pred_check
    _
  $region7: #{fastspeech2_loss.3} parent=0 // pred_check_branch
    %14 = sbr.rel (0) target = $region9
  $region8: #{fastspeech2_loss.3} parent=0 // pred_region
    _
  $region9: #{fastspeech2_loss.3} parent=0 // pred_fallthru
    _
  // Predicated region
  $region10: #{fastspeech2_loss.3} parent=0 // pred_check
    _
  $region11: #{fastspeech2_loss.3} parent=0 // pred_check_branch
    %16 = sbr.rel (0) target = $region13
  $region12: #{fastspeech2_loss.3} parent=0 // pred_region
    _
  $region13: #{fastspeech2_loss.3} parent=0 // pred_fallthru
    _
  // Predicated region
  $region14: #{fastspeech2_loss.3} parent=0 // pred_check
    _
  $region15: #{fastspeech2_loss.3} parent=0 // pred_check_branch
    %18 = sbr.rel (0) target = $region17
  $region16: #{fastspeech2_loss.3} parent=0 // pred_region
    _
  $region17: #{fastspeech2_loss.3} parent=0 // pred_fallthru
    _
  // Predicated region
  $region18: #{fastspeech2_loss.3} parent=0 // pred_check
    _
  $region19: #{fastspeech2_loss.3} parent=0 // pred_check_branch
    %20 = sbr.rel (0) target = $region21
  $region20: #{fastspeech2_loss.3} parent=0 // pred_region
    _
  $region21: #{fastspeech2_loss.3} parent=0 // pred_fallthru
    _
  // Predicated region
  $region22: #{fastspeech2_loss.3} parent=0 // pred_check
    _
  $region23: #{fastspeech2_loss.3} parent=0 // pred_check_branch
    %22 = sbr.rel (0) target = $region25
  $region24: #{fastspeech2_loss.3} parent=0 // pred_region
    _
  $region25: #{fastspeech2_loss.3} parent=0 // pred_fallthru
    _
  %v23 = vld [vmem:[%s1] sm:$0x3]
  %v24 = vcvt.s32.f32 %v23
  %v25 = vadd.f32 %v24, 1.0
  %v26 = vlog2.pop %v25
  %v27 = vmul.f32 %v26, 0.6931472
  %v28 = vld [vmem:[%s0] sm:$0x3]
  %v29 = vsub.f32 %v28, %v27
  %v30 = vmul.f32 %v29, %v29
  %vm31 = vcmask 58368
  %v32 = vsel %vm31, %v30, 0.0
  %33 = vadd.xlane.f32.xlu0 %v32
  %v34 = vpop.xlane.xlu0 %33
  %v35 = vrot.slane %v34, 4
  %v36 = vadd.f32 %v34, %v35
  %v37 = vrot.slane %v36, 2
  %v38 = vadd.f32 %v36, %v37
  %v39 = vrot.slane %v38, 1
  %v40 = vadd.f32 %v38, %v39
  %s41 = vtos %v40
  %v42 = vrcp.pop 16.0
  %s43 = vtos %v42
  %s44 = smul.f32 %s41, %s43
  %v45 = vld [vmem:[%s3] sm:$0x3]
  %v46 = vadd.f32 %v45, 1.0
  %v47 = vlog2.pop %v46
  %v48 = vmul.f32 %v47, 0.6931472
  %v49 = vld [vmem:[%s2] sm:$0x3]
  %v50 = vsub.f32 %v49, %v48
  %v51 = vmul.f32 %v50, %v50
  %v52 = vsel %vm31, %v51, 0.0
  %53 = vadd.xlane.f32.xlu0 %v52
  %v54 = vpop.xlane.xlu0 %53
  %v55 = vrot.slane %v54, 4
  %v56 = vadd.f32 %v54, %v55
  %v57 = vrot.slane %v56, 2
  %v58 = vadd.f32 %v56, %v57
  %v59 = vrot.slane %v58, 1
  %v60 = vadd.f32 %v58, %v59
  %s61 = vtos %v60
  %v62 = vrcp.pop 16.0
  %s63 = vtos %v62
  %s64 = smul.f32 %s61, %s63
  %v65 = vld [vmem:[%s5] sm:$0x3]
  %v66 = vadd.f32 %v65, 1.0
  %v67 = vlog2.pop %v66
  %v68 = vmul.f32 %v67, 0.6931472
  %v69 = vld [vmem:[%s4] sm:$0x3]
  %v70 = vsub.f32 %v69, %v68
  %v71 = vmul.f32 %v70, %v70
  %v72 = vsel %vm31, %v71, 0.0
  %73 = vadd.xlane.f32.xlu0 %v72
  %v74 = vpop.xlane.xlu0 %73
  %v75 = vrot.slane %v74, 4
  %v76 = vadd.f32 %v74, %v75
  %v77 = vrot.slane %v76, 2
  %v78 = vadd.f32 %v76, %v77
  %v79 = vrot.slane %v78, 1
  %v80 = vadd.f32 %v78, %v79
  %s81 = vtos %v80
  %v82 = vrcp.pop 16.0
  %s83 = vtos %v82
  %s84 = smul.f32 %s81, %s83
  %v85 = vlaneseq
  %v86 = vshrl.u32 %v85, 7
  %vm87 = vcmp.eq.s32.totalorder %v86, 0
  %vm88 = vcmp.eq.s32.totalorder %v86, 1
  %vm89 = vcmp.eq.s32.totalorder %v86, 2
  %v90 = vstv %s84
  %v91 = vsel %vm89, %v90, 0.0
  %v92 = vstv %s64
  %v93 = vsel %vm88, %v92, %v91
  %v94 = vstv %s44
  %v95 = vsel %vm87, %v94, %v93
  %96 = vst [vmem:[%s6] sm:$0xff] %v95
  // Predicated region
  $region26: #{fastspeech2_loss.3} parent=0 // pred_check
    _
  $region27: #{fastspeech2_loss.3} parent=0 // pred_check_branch
    %98 = sbr.rel (0) target = $region29
  $region28: #{fastspeech2_loss.3} parent=0 // pred_region
    _
  $region29: #{fastspeech2_loss.3} parent=0 // pred_fallthru
    _
  // Predicated region
  $region30: #{fastspeech2_loss.3} parent=0 // pred_check
    _
  $region31: #{fastspeech2_loss.3} parent=0 // pred_check_branch
    %100 = sbr.rel (0) target = $region33
  $region32: #{fastspeech2_loss.3} parent=0 // pred_region
    _
  $region33: #{fastspeech2_loss.3} parent=0 // pred_fallthru
    _

// kernel: fastspeech2_loss.2
$region0: #{fastspeech2_loss.2}
  #allocation0 [shape = 'u32[]', space=smem, size = 0x4, offset = 0x4, fixed_abs, tag = 'smem constant byte address 0x4 - core index']
  #allocation1 [shape = 'u32[144,128]{1,0:T(1,128)}', space=vmem, size = 0x12000, scoped, tag = 'internal scratch']
  %s0 = inlined_call_operand.hbm [shape: f32[32,32], index: 0, kind: input, shape index: {}]
  %s1 = inlined_call_operand.hbm [shape: f32[32,32], index: 1, kind: input, shape index: {}]
  %s2 = inlined_call_operand.vmem [shape: f32[8,32], index: 2, kind: output, shape index: {}]
  %s3 = sld [smem:[#allocation0]]
  $region30: #{fastspeech2_loss.2} parent=0
    _
  %s5 = ssub.s32 1, %s3
  %s6 = scalar_select 0, %s5, %s3
  $region1: #{fastspeech2_loss.2} parent=0
    #allocation2 [shape = 'u8[16384]{0}', space=vmem, size = 0x4000, scoped, tag = 'input window, operand 0, single buffered']
    #allocation3 [shape = 's32[1]{0}', space=sflag, size = 0x4, scoped, tag = 'scoped memory for fastspeech2_loss.2']
    #allocation4 [shape = 'u8[16384]{0}', space=vmem, size = 0x4000, scoped, tag = 'input window, operand 1, single buffered']
    #allocation5 [shape = 's32[1]{0}', space=sflag, size = 0x4, scoped, tag = 'scoped memory for fastspeech2_loss.2']
    %7 = vsyncpa [#allocation3], 0
    %8 = vsyncpa [#allocation5], 0
    // Predicated region
    $region2: #{fastspeech2_loss.2} parent=1 // pred_check
      _
    $region3: #{fastspeech2_loss.2} parent=1 // pred_check_branch
      %10 = sbr.rel (0) target = $region5
    $region4: #{fastspeech2_loss.2} parent=1 // pred_region
      %s11 = sadd.s32 0, 0
      %p12 = scmp.lt.s32.totalorder %s11, 0
      %s13 = scalar_select %p12, %s11, 0
      %s14 = smul.u32 4, %s13
      %s16 = ssub.s32 512, 512
      %17 = vsyncadd [#allocation3], %s16
      %s18 = smul.addr %s14, 128
      %s19 = scalar_lea.hbm %s0, %s18
      %s20 = sshll.u32 [#allocation2], 4
      %s21 = int_to_ptr.vmem [resolvable:$true] %s20
      %26 = dma.hbm_to_vmem [thread:$0]  %s19, 512, %s21, [#allocation3], 128, 128, 8
    $region5: #{fastspeech2_loss.2} parent=1 // pred_fallthru
      _
    // Predicated region
    $region6: #{fastspeech2_loss.2} parent=1 // pred_check
      _
    $region7: #{fastspeech2_loss.2} parent=1 // pred_check_branch
      %28 = sbr.rel (0) target = $region9
    $region8: #{fastspeech2_loss.2} parent=1 // pred_region
      %s29 = sadd.s32 0, 0
      %p30 = scmp.lt.s32.totalorder %s29, 0
      %s31 = scalar_select %p30, %s29, 0
      %s32 = smul.u32 4, %s31
      %s34 = ssub.s32 512, 512
      %35 = vsyncadd [#allocation5], %s34
      %s36 = smul.addr %s32, 128
      %s37 = scalar_lea.hbm %s1, %s36
      %s38 = sshll.u32 [#allocation4], 4
      %s39 = int_to_ptr.vmem [resolvable:$true] %s38
      %44 = dma.hbm_to_vmem [thread:$0]  %s37, 512, %s39, [#allocation5], 128, 128, 8
    $region9: #{fastspeech2_loss.2} parent=1 // pred_fallthru
      _
    // Predicated region
    $region10: #{fastspeech2_loss.2} parent=1 // pred_check
      _
    $region11: #{fastspeech2_loss.2} parent=1 // pred_check_branch
      %46 = sbr.rel (0) target = $region13
    $region12: #{fastspeech2_loss.2} parent=1 // pred_region
      %47 = dma.done [#allocation3], 512
    $region13: #{fastspeech2_loss.2} parent=1 // pred_fallthru
      _
    // Predicated region
    $region14: #{fastspeech2_loss.2} parent=1 // pred_check
      _
    $region15: #{fastspeech2_loss.2} parent=1 // pred_check_branch
      %49 = sbr.rel (0) target = $region17
    $region16: #{fastspeech2_loss.2} parent=1 // pred_region
      %50 = dma.done [#allocation5], 512
    $region17: #{fastspeech2_loss.2} parent=1 // pred_fallthru
      _
    %s51 = sadd.s32 0, 0
    %p52 = scmp.lt.s32.totalorder %s51, 0
    %s53 = scalar_select %p52, %s51, 0
    %s54 = smul.u32 4, %s53
    %s55 = sadd.s32 0, 0
    %p56 = scmp.lt.s32.totalorder %s55, 0
    %s57 = scalar_select %p56, %s55, 0
    %s58 = smul.u32 4, %s57
    %p59 = scmp.eq.s32.totalorder 0, 0
    // Predicated region
    $region18: #{fastspeech2_loss.2} parent=1 // pred_check
      %p60 = pneg %p59
    $region19: #{fastspeech2_loss.2} parent=1 // pred_check_branch
      %62 = sbr.rel (%p60) target = $region21
    $region20: #{fastspeech2_loss.2} parent=1 // pred_region
      %vm63 = vcmask 261120
      %64 = vst.msk [vmem:[%s2] sm:$0xff] %vm63, 0.0
    $region21: #{fastspeech2_loss.2} parent=1 // pred_fallthru
      _
    %v65 = vld [vmem:[#allocation2] sm:$0xff]
    %v66 = vld [vmem:[#allocation2 + $0x8] sm:$0xff]
    %v67 = vld [vmem:[#allocation2 + $0x10] sm:$0xff]
    %v68 = vld [vmem:[#allocation2 + $0x18] sm:$0xff]
    %v69 = vld [vmem:[#allocation4] sm:$0xff]
    %v70 = vld [vmem:[#allocation4 + $0x8] sm:$0xff]
    %v71 = vld [vmem:[#allocation4 + $0x10] sm:$0xff]
    %v72 = vld [vmem:[#allocation4 + $0x18] sm:$0xff]
    %v73 = vsub.f32 %v65, %v69
    %v74 = vsub.f32 %v66, %v70
    %v75 = vsub.f32 %v67, %v71
    %v76 = vsub.f32 %v68, %v72
    %v77 = vmul.f32 %v73, %v73
    %v78 = vmul.f32 %v74, %v74
    %v79 = vmul.f32 %v75, %v75
    %v80 = vmul.f32 %v76, %v76
    %vm81 = vcmask 261120
    %v82 = vsel %vm81, %v77, 0.0
    %v83 = vsel %vm81, %v78, 0.0
    %v84 = vadd.f32 %v82, %v83
    %v85 = vsel %vm81, %v79, 0.0
    %v86 = vadd.f32 %v84, %v85
    %v87 = vsel %vm81, %v80, 0.0
    %v88 = vadd.f32 %v86, %v87
    %v89 = vld [vmem:[%s2] sm:$0xff]
    %v90 = vadd.f32 %v89, %v88
    %91 = vst.msk [vmem:[%s2] sm:$0xff] %vm81, %v90
    // Predicated region
    $region22: #{fastspeech2_loss.2} parent=1 // pred_check
      _
    $region23: #{fastspeech2_loss.2} parent=1 // pred_check_branch
      %93 = sbr.rel (0) target = $region25
    $region24: #{fastspeech2_loss.2} parent=1 // pred_region
      _
    $region25: #{fastspeech2_loss.2} parent=1 // pred_fallthru
      _
    // Predicated region
    $region26: #{fastspeech2_loss.2} parent=1 // pred_check
      _
    $region27: #{fastspeech2_loss.2} parent=1 // pred_check_branch
      %95 = sbr.rel (0) target = $region29
    $region28: #{fastspeech2_loss.2} parent=1 // pred_region
      _
    $region29: #{fastspeech2_loss.2} parent=1 // pred_fallthru
      _
    %96 = vsyncpa [#allocation3], 1
    %97 = vsyncpa [#allocation5], 1

</llo_original>
